<compile_context>
chip_gen: v7x
topology: tpu7x:2x2x1
jax: 0.10.0
libtpu: 0.0.40
codegen_flags: <defaults>
</compile_context>

<pallas_src>
import jax
import jax.numpy as jnp
from jax.experimental import pallas as pl
from jax.experimental.pallas import tpu as pltpu


def _last_col_cat_kernel(x2_ref, x3_ref, o_ref):
    # x2_ref: (1, 8), x3_ref: (1, 1), o_ref: (1, 2)
    x2 = x2_ref[...]                       # one vreg load
    x3 = x3_ref[...]
    last_col = x2[:, -1:]                  # (1, 1) == cat([x1, x2])[:, -1:]
    o_ref[...] = jnp.concatenate([last_col, x3], axis=-1)   # (1, 2)


def model_forward(x1, x2, x3):
    # x1 is intentionally unused: cat([x1, x2], dim=1)[:, -1] == x2[:, -1]
    # because x2 has width >= 1 (static shape check below).
    del x1
    assert x2.shape[1] >= 1, "simplification requires x2 to have >= 1 column"

    out_shape = jax.ShapeDtypeStruct((x2.shape[0], 2), x2.dtype)
    return pl.pallas_call(
        _last_col_cat_kernel,
        out_shape=out_shape,
        in_specs=[
            pl.BlockSpec(memory_space=pltpu.VMEM),
            pl.BlockSpec(memory_space=pltpu.VMEM),
        ],
        out_specs=pl.BlockSpec(memory_space=pltpu.VMEM),
    )(x2, x3)


if __name__ == "__main__":
    key = jax.random.PRNGKey(0)
    k1, k2, k3 = jax.random.split(key, 3)
    x1 = jax.random.normal(k1, (1, 4), dtype=jnp.float32)
    x2 = jax.random.normal(k2, (1, 8), dtype=jnp.float32)
    x3 = jax.random.normal(k3, (1, 1), dtype=jnp.float32)

    out = model_forward(x1, x2, x3)
    jax.block_until_ready(out)

    # Reference check in plain JAX (same keepdim interpretation of the
    # original program: cat([x1, x2])[:, -1:] then cat with x3).
    cat12 = jnp.concatenate([x1, x2], axis=1)
    ref = jnp.concatenate([cat12[:, -1:], x3], axis=1)
    assert out.shape == (1, 2), out.shape
    assert jnp.allclose(out, ref), (out, ref)

    print("KERNEL_OK")
</pallas_src>

<mosaic_0001>
module attributes {stable_mosaic.version = 11 : i64} {
  func.func @_last_col_cat_kernel(%arg0: memref<1x8xf32, #tpu.memory_space<vmem>>, %arg1: memref<1x1xf32, #tpu.memory_space<vmem>>, %arg2: memref<1x2xf32, #tpu.memory_space<vmem>>) attributes {dimension_semantics = [], scalar_prefetch = 0 : i64, scratch_operands = 0 : i64, tpu.core_type = #tpu.core_type<tc>} {
    %c0 = arith.constant 0 : index
    %c0_0 = arith.constant 0 : index
    %0 = vector.load %arg0[%c0, %c0_0] : memref<1x8xf32, #tpu.memory_space<vmem>>, vector<1x8xf32>
    %c0_1 = arith.constant 0 : index
    %c0_2 = arith.constant 0 : index
    %1 = vector.load %arg1[%c0_1, %c0_2] : memref<1x1xf32, #tpu.memory_space<vmem>>, vector<1x1xf32>
    %2 = vector.extract_strided_slice %0 {offsets = [0, 7], sizes = [1, 1], strides = [1, 1]} : vector<1x8xf32> to vector<1x1xf32>
    %3 = tpu.concatenate %2, %1 in 1 : vector<1x1xf32>, vector<1x1xf32> -> vector<1x2xf32>
    %c0_3 = arith.constant 0 : index
    %c0_4 = arith.constant 0 : index
    %4 = vector.load %arg2[%c0_3, %c0_4] : memref<1x2xf32, #tpu.memory_space<vmem>>, vector<1x2xf32>
    tpu.vector_store %arg2[%c0_3, %c0_4], %3 {strides = array<i32>} : memref<1x2xf32, #tpu.memory_space<vmem>>, vector<1x2xf32>,
    return
  }
}

</mosaic_0001>

<llo_original>
// kernel: tpu_custom_call.1
$region0: #{tpu_custom_call.1}
  #allocation0 [shape = 'u32[]', space=smem, size = 0x4, offset = 0x4, fixed_abs, tag = 'smem constant byte address 0x4 - core index']
  #allocation1 [shape = 'u32[144,128]{1,0:T(1,128)}', space=vmem, size = 0x12000, scoped, tag = 'internal scratch']
  #allocation2 [shape = 'f32[1,1]{1,0:T(1,128)S(1)}', space=vmem, size = 0x200, scoped, tag = 'scoped memory for tpu_custom_call.1']
  %s0 = inlined_call_operand.vmem [shape: f32[1,8], index: 0, kind: input, shape index: {}]
  %s1 = inlined_call_operand.<no memory space> [shape: f32[1,1], index: 1, kind: input, shape index: {}]
  %s2 = inlined_call_operand.hbm [shape: f32[1,2], index: 2, kind: output, shape index: {}]
  %s3 = sld [smem:[#allocation0]]
  $region18: #{tpu_custom_call.1} parent=0
    _
  %s5 = ssub.s32 1, %s3
  %s6 = scalar_select 0, %s5, %s3
  %v7 = vstv %s1
  %8 = vst [vmem:[#allocation2] sm:$0x1] %v7
  $region1: #{tpu_custom_call.1} parent=0
    #allocation3 [shape = 'u8[512]{0}', space=vmem, size = 0x400, scoped, tag = 'output window, operand 0, single buffered']
    #allocation4 [shape = 's32[1]{0}', space=sflag, size = 0x4, scoped, tag = 'scoped memory for tpu_custom_call.1']
    %9 = vsyncpa [#allocation4], 0
    // Predicated region
    $region2: #{tpu_custom_call.1} parent=1 // pred_check
      _
    $region3: #{tpu_custom_call.1} parent=1 // pred_check_branch
      %11 = sbr.rel (0) target = $region5
    $region4: #{tpu_custom_call.1} parent=1 // pred_region
      _
    $region5: #{tpu_custom_call.1} parent=1 // pred_fallthru
      _
    // Predicated region
    $region6: #{tpu_custom_call.1} parent=1 // pred_check
      _
    $region7: #{tpu_custom_call.1} parent=1 // pred_check_branch
      %13 = sbr.rel (0) target = $region9
    $region8: #{tpu_custom_call.1} parent=1 // pred_region
      _
    $region9: #{tpu_custom_call.1} parent=1 // pred_fallthru
      _
    %v14 = vld [vmem:[%s0] sm:$0x1]
    %v15 = vld [vmem:[#allocation2] sm:$0x1]
    %v17 = vlaneseq
    %v18 = vshrl.u32 %v17, 7
    %v19 = vsub.s32 0, %v18
    %v20 = vrot.slane %v14, %v19
    %21 = vrot.lane.b32.xlu0 %v20, 121
    %v22 = vpop.permute.xlu0 %21
    %v25 = vlaneseq
    %v26 = vshrl.u32 %v25, 7
    %v27 = vsub.s32 0, %v26
    %v28 = vrot.slane %v15, %v27
    %29 = vrot.lane.b32.xlu0 %v28, 1
    %v30 = vpop.permute.xlu0 %29
    %vm32 = vcmask 7168
    %v33 = vsel %vm32, %v22, %v30
    %vm34 = vcmask 8192
    %35 = vst.msk [vmem:[#allocation3] sm:$0x1] %vm34, %v33
    // Predicated region
    $region10: #{tpu_custom_call.1} parent=1 // pred_check
      _
    $region11: #{tpu_custom_call.1} parent=1 // pred_check_branch
      %37 = sbr.rel (0) target = $region13
    $region12: #{tpu_custom_call.1} parent=1 // pred_region
      %s39 = ssub.s32 16, 16
      %40 = vsyncadd [#allocation4], %s39
      %s42 = sshll.u32 [#allocation3], 4
      %s43 = int_to_ptr.vmem [resolvable:$true] %s42
      %45 = dma.vmem_to_hbm [thread:$0]  %s43, 16, %s2, [#allocation4]
    $region13: #{tpu_custom_call.1} parent=1 // pred_fallthru
      _
    // Predicated region
    $region14: #{tpu_custom_call.1} parent=1 // pred_check
      _
    $region15: #{tpu_custom_call.1} parent=1 // pred_check_branch
      %47 = sbr.rel (0) target = $region17
    $region16: #{tpu_custom_call.1} parent=1 // pred_region
      %48 = dma.done [#allocation4], 16
    $region17: #{tpu_custom_call.1} parent=1 // pred_fallthru
      _
    %49 = vsyncpa [#allocation4], 1

</llo_original>
